<compile_context>
chip_gen: v5e
topology: v5e:2x2
jax: 0.10.0
libtpu: 0.0.40
codegen_flags: <defaults>
</compile_context>

<pallas_src>
import functools

import jax
import jax.numpy as jnp
from jax import lax
from jax.experimental import pallas as pl
from jax.experimental.pallas import tpu as pltpu


def _round_up(x, m):
    return (x + m - 1) // m * m


def _cdiv(a, b):
    return (a + b - 1) // b


def _pick_batch_tile(B, Lx):
    """Batch tile TB (multiple of 8).

    Targets ~8K flattened im2col rows (TB * Lx) per grid step so per-step pipeline
    overhead (~0.35 us) is amortized, caps TB at ~half the batch so batches large
    enough to split always yield >= 2 grid steps (v7x has 2 TensorCores; also keeps
    the input DMA pipeline busy), then re-balances TB so grid_steps * TB wastes as
    little batch padding as possible.
    """
    tb = max(8, (8192 // max(Lx, 1)) // 8 * 8)
    tb = min(tb, max(8, _round_up(_cdiv(B, 2), 8)))
    steps = _cdiv(B, tb)
    tb = max(8, _round_up(_cdiv(B, steps), 8))
    return tb


def _cnn_kernel(tok_ref, emb_ref, w_ref, fcw_ref, bm_ref, out_ref, *,
                TB, L, Lx, D, V_pad, KD, FC_pad, kmax):
    # tok_ref : (TB, Lx)        int32  token ids, time-extended/padded with sentinel V
    # emb_ref : (V_pad, D)      bf16   embedding table (rows >= V are zero)
    # w_ref   : (KD, FC_pad)    bf16   KD = kmax*D fused conv weights (offsets in K)
    # fcw_ref : (FC_pad, 128)   bf16   zero-padded fc weight (row FC carries fc bias)
    # bm_ref  : (L, FC_pad)     f32    conv bias on valid (t, c), -1e30 on invalid
    # out_ref : (TB, 128)       f32    lane-dense logits (first n_out lanes real)

    # --- embedding gather on the MXU: one-hot(token) @ table (table is VMEM-resident) ---
    tok = tok_ref[...]                                               # (TB, Lx) int32
    lanes = lax.broadcasted_iota(jnp.int32, (TB, Lx, V_pad), 2)
    oh = (tok[:, :, None] == lanes).astype(jnp.bfloat16)             # (TB, Lx, V_pad)
    emb = jnp.dot(oh.reshape(TB * Lx, V_pad), emb_ref[...],
                  preferred_element_type=jnp.float32)                # (TB*Lx, D) f32 (exact)
    emb3 = emb.astype(jnp.bfloat16).reshape(TB, Lx, D)

    # --- in-VMEM im2col: kernel-row offsets live in the contraction dim (K = kmax*D) ---
    xk = jnp.concatenate([emb3[:, j:j + L, :] for j in range(kmax)], axis=2)
    scores = jnp.dot(xk.reshape(TB * L, KD), w_ref[...],
                     preferred_element_type=jnp.float32)             # (TB*L, FC_pad)
    scores = scores.reshape(TB, L, FC_pad)

    # --- bias + validity mask folded into one additive constant; relu clamps masked
    #     (-1e30) positions to 0, which the max over time then ignores (relu >= 0). ---
    act = jnp.maximum(scores + bm_ref[...][None, :, :], 0.0)
    feats = jnp.max(act, axis=1)                                     # (TB, FC_pad)

    # --- fc layer (dropout is identity in eval); fc bias rides on feature lane FC == 1 ---
    out_ref[...] = jnp.dot(feats.astype(jnp.bfloat16), fcw_ref[...],
                           preferred_element_type=jnp.float32)       # (TB, 128)


def pack_cnn_params(params, kernel_sizes, seq_len):
    """One-time (outside jit) packing of weights/constants into kernel-ready arrays."""
    kernel_sizes = tuple(int(k) for k in kernel_sizes)
    emb_tbl = params["embedding"]                     # (V, D) f32
    V, D = emb_tbl.shape
    C = params["conv0_w"].shape[2]
    F = len(kernel_sizes)
    kmax = max(kernel_sizes)
    L = int(seq_len)
    assert L >= kmax, "sequence shorter than the largest conv kernel (torch would error)"

    FC = F * C
    FC_pad = _round_up(FC + 1, 128)                   # +1 spare lane carries the fc bias
    OUT_PAD = 128
    KD = kmax * D
    Lx = _round_up(L + kmax - 1, 8)                   # time-extended length (im2col tail)
    V_pad = _round_up(V + 1, 128)                     # rows >= V are zero => padding sentinel

    emb_pad = jnp.zeros((V_pad, D), jnp.float32).at[:V, :].set(emb_tbl)

    # Fused conv weight: column block i*C..(i+1)*C holds filter i; row block j*D..(j+1)*D
    # holds its j-th kernel row (zero where j >= k_i).
    w_all = jnp.zeros((KD, FC_pad), jnp.float32)
    bias_mask = jnp.full((L, FC_pad), -1e30, jnp.float32)
    for i, k in enumerate(kernel_sizes):
        w_i = params[f"conv{i}_w"]                    # (k, D, C)  (torch (C,1,k,D) transposed)
        b_i = params[f"conv{i}_b"]                    # (1, C)
        for j in range(k):
            w_all = w_all.at[j * D:(j + 1) * D, i * C:(i + 1) * C].set(w_i[j])
        # valid conv output positions for this filter: t in [0, L-k]
        bias_mask = bias_mask.at[0:L - k + 1, i * C:(i + 1) * C].set(b_i[0])
    # Always-one feature lane FC (its W column is zero -> score 0, bias 1 -> relu max 1).
    bias_mask = bias_mask.at[0, FC].set(1.0)

    fc_w = params["fc_w"]                             # (FC, n_out)
    fc_b = params["fc_b"]                             # (1, n_out)
    n_out = fc_w.shape[1]
    fcw_pad = jnp.zeros((FC_pad, OUT_PAD), jnp.float32)
    fcw_pad = fcw_pad.at[:FC, :n_out].set(fc_w)
    fcw_pad = fcw_pad.at[FC, :n_out].set(fc_b[0])     # fc bias via the always-one lane

    packed = dict(
        emb=emb_pad.astype(jnp.bfloat16),
        w_all=w_all.astype(jnp.bfloat16),
        fcw=fcw_pad.astype(jnp.bfloat16),
        bias_mask=bias_mask,
    )
    meta = dict(L=L, Lx=Lx, D=D, V=V, V_pad=V_pad, KD=KD, FC_pad=FC_pad,
                OUT_PAD=OUT_PAD, kmax=kmax, n_out=n_out)
    return packed, meta


def cnn_sentence_forward(token_ids, packed, meta):
    """Forward pass. token_ids: (B, L) int32. Returns logits (B, n_out) float32."""
    L, Lx, D = meta["L"], meta["Lx"], meta["D"]
    V, V_pad, KD = meta["V"], meta["V_pad"], meta["KD"]
    FC_pad, OUT_PAD, kmax, n_out = meta["FC_pad"], meta["OUT_PAD"], meta["kmax"], meta["n_out"]

    B, L_in = token_ids.shape
    assert L_in == L, "token_ids length must match the packed sequence length"

    TB = _pick_batch_tile(B, Lx)
    B_pad = _round_up(B, TB)

    # Pad batch and extend time with the sentinel id V (gathers the all-zero table row).
    tok_ext = jnp.full((B_pad, Lx), V, jnp.int32)
    tok_ext = tok_ext.at[:B, :L].set(token_ids.astype(jnp.int32))

    kernel = functools.partial(
        _cnn_kernel, TB=TB, L=L, Lx=Lx, D=D, V_pad=V_pad,
        KD=KD, FC_pad=FC_pad, kmax=kmax)

    out = pl.pallas_call(
        kernel,
        out_shape=jax.ShapeDtypeStruct((B_pad, OUT_PAD), jnp.float32),
        grid=(B_pad // TB,),
        in_specs=[
            pl.BlockSpec((TB, Lx), lambda b: (b, 0)),          # token ids: the only streamed input
            pl.BlockSpec((V_pad, D), lambda b: (0, 0)),        # embedding table (fetched once)
            pl.BlockSpec((KD, FC_pad), lambda b: (0, 0)),      # fused conv weights
            pl.BlockSpec((FC_pad, OUT_PAD), lambda b: (0, 0)), # fc weight (+ bias row)
            pl.BlockSpec((L, FC_pad), lambda b: (0, 0)),       # bias + validity mask
        ],
        out_specs=pl.BlockSpec((TB, OUT_PAD), lambda b: (b, 0)),
        compiler_params=pltpu.CompilerParams(
            dimension_semantics=("parallel",),
            # Comfortable on all gens (v7x has 64 MiB physical VMEM); per-step footprint
            # here is only a few MiB even at the ~8K-row batch tile.
            vmem_limit_bytes=48 * 1024 * 1024,
        ),
    )(tok_ext, packed["emb"], packed["w_all"], packed["fcw"], packed["bias_mask"])

    return out[:B, :n_out]


def _reference_forward(token_ids, params, kernel_sizes):
    """Pure-JAX reference mirroring the kernel's bf16 matmul operands (f32 math)."""
    emb = jnp.take(params["embedding"], token_ids, axis=0)
    emb = emb.astype(jnp.bfloat16).astype(jnp.float32)
    B, L, D = emb.shape
    feats = []
    for i, k in enumerate(kernel_sizes):
        w = params[f"conv{i}_w"].astype(jnp.bfloat16).astype(jnp.float32)  # (k, D, C)
        b = params[f"conv{i}_b"]                                            # (1, C)
        Lout = L - k + 1
        scores = jnp.zeros((B, Lout, w.shape[2]), jnp.float32)
        for j in range(k):
            scores = scores + jnp.einsum("bld,dc->blc", emb[:, j:j + Lout, :], w[j])
        scores = scores + b[:, None, :]
        feats.append(jnp.max(jnp.maximum(scores, 0.0), axis=1))
    x = jnp.concatenate(feats, axis=1).astype(jnp.bfloat16).astype(jnp.float32)
    fc_w = params["fc_w"].astype(jnp.bfloat16).astype(jnp.float32)
    fc_b = params["fc_b"].astype(jnp.bfloat16).astype(jnp.float32)
    return x @ fc_w + fc_b


def init_params(key, vocab_size, vec_len, kernel_sizes, kernel_num):
    """Deterministic synthetic parameter init (shapes match the torch module)."""
    params = {}
    keys = jax.random.split(key, 2 + 2 * len(kernel_sizes) + 2)
    ki = 0
    params["embedding"] = jax.random.normal(keys[ki], (vocab_size, vec_len), jnp.float32) * 0.1
    ki += 1
    for i, k in enumerate(kernel_sizes):
        # torch Conv2d weight (C, 1, k, D) -> stored here as (k, D, C)
        params[f"conv{i}_w"] = jax.random.normal(
            keys[ki], (k, vec_len, kernel_num), jnp.float32) * 0.1
        ki += 1
        params[f"conv{i}_b"] = jax.random.normal(
            keys[ki], (1, kernel_num), jnp.float32) * 0.1
        ki += 1
    feat_dim = len(kernel_sizes) * kernel_num
    params["fc_w"] = jax.random.normal(keys[ki], (feat_dim, 2), jnp.float32) * 0.1
    ki += 1
    params["fc_b"] = jax.random.normal(keys[ki], (1, 2), jnp.float32) * 0.1
    return params


if __name__ == "__main__":
    vocab_size = 50
    vec_len = 32
    kernel_sizes = [3, 4, 5]
    kernel_num = 8
    batch = 2
    seq_len = 16

    key = jax.random.PRNGKey(0)
    k_param, k_tok = jax.random.split(key)
    params = init_params(k_param, vocab_size, vec_len, kernel_sizes, kernel_num)
    token_ids = jax.random.randint(k_tok, (batch, seq_len), 0, vocab_size, dtype=jnp.int32)

    # Pack once, outside jit (weight padding / bf16 casts are not re-traced per call).
    packed, meta = pack_cnn_params(params, kernel_sizes, seq_len)

    fwd = jax.jit(lambda tok, p: cnn_sentence_forward(tok, p, meta))
    logits = fwd(token_ids, packed)
    jax.block_until_ready(logits)

    ref = _reference_forward(token_ids, params, kernel_sizes)
    assert logits.shape == (batch, 2)
    max_err = float(jnp.max(jnp.abs(logits - ref)))
    assert jnp.allclose(logits, ref, atol=1e-2, rtol=1e-2), f"max abs err {max_err}"

    print("KERNEL_OK")
</pallas_src>

<mosaic_0001>
module attributes {stable_mosaic.version = 11 : i64} {
  func.func @_cnn_kernel(%arg0: i32, %arg1: memref<8x24xi32, #tpu.memory_space<vmem>>, %arg2: memref<128x32xbf16, #tpu.memory_space<vmem>>, %arg3: memref<160x128xbf16, #tpu.memory_space<vmem>>, %arg4: memref<128x128xbf16, #tpu.memory_space<vmem>>, %arg5: memref<16x128xf32, #tpu.memory_space<vmem>>, %arg6: memref<8x128xf32, #tpu.memory_space<vmem>>) attributes {dimension_semantics = [#tpu.dimension_semantics<parallel>], iteration_bounds = array<i64: 1>, scalar_prefetch = 0 : i64, scratch_operands = 0 : i64, tpu.core_type = #tpu.core_type<tc>, window_params = [{transform_indices = @transform_0, window_bounds = array<i64: 8, 24>}, {pipeline_mode = #tpu.pipeline_mode<synchronous>, transform_indices = @transform_1, window_bounds = array<i64: 128, 32>}, {pipeline_mode = #tpu.pipeline_mode<synchronous>, transform_indices = @transform_2, window_bounds = array<i64: 160, 128>}, {pipeline_mode = #tpu.pipeline_mode<synchronous>, transform_indices = @transform_3, window_bounds = array<i64: 128, 128>}, {pipeline_mode = #tpu.pipeline_mode<synchronous>, transform_indices = @transform_4, window_bounds = array<i64: 16, 128>}, {transform_indices = @transform_5, window_bounds = array<i64: 8, 128>}]} {
    %c0 = arith.constant 0 : index
    %c0_0 = arith.constant 0 : index
    %0 = vector.load %arg1[%c0, %c0_0] : memref<8x24xi32, #tpu.memory_space<vmem>>, vector<8x24xi32>
    %1 = tpu.iota {dimensions = array<i32: 2>} : vector<8x24x128xi32>
    %2 = vector.shape_cast %0 : vector<8x24xi32> to vector<8x24x1xi32>
    %3 = vector.broadcast %2 : vector<8x24x1xi32> to vector<8x24x128xi32>
    %4 = arith.cmpi eq, %3, %1 : vector<8x24x128xi32>
    %5 = arith.extui %4 : vector<8x24x128xi1> to vector<8x24x128xi32>
    %6 = arith.sitofp %5 : vector<8x24x128xi32> to vector<8x24x128xf32>
    %7 = arith.truncf %6 : vector<8x24x128xf32> to vector<8x24x128xbf16>
    %8 = vector.shape_cast %7 : vector<8x24x128xbf16> to vector<192x128xbf16>
    %c0_1 = arith.constant 0 : index
    %c0_2 = arith.constant 0 : index
    %9 = vector.load %arg2[%c0_1, %c0_2] : memref<128x32xbf16, #tpu.memory_space<vmem>>, vector<128x32xbf16>
    %cst = arith.constant dense<0.000000e+00> : vector<192x32xf32>
    %10 = tpu.matmul %8, %9, %cst {dimension_numbers = #tpu.dot_dimension_numbers<[1], [0], [0], [1], [0, 0, 1, 1], [], []>} : vector<192x128xbf16>, vector<128x32xbf16>, vector<192x32xf32> -> vector<192x32xf32>
    %11 = arith.truncf %10 : vector<192x32xf32> to vector<192x32xbf16>
    %12 = vector.shape_cast %11 : vector<192x32xbf16> to vector<8x24x32xbf16>
    %13 = vector.extract_strided_slice %12 {offsets = [0, 0, 0], sizes = [8, 16, 32], strides = [1, 1, 1]} : vector<8x24x32xbf16> to vector<8x16x32xbf16>
    %14 = vector.extract_strided_slice %12 {offsets = [0, 1, 0], sizes = [8, 16, 32], strides = [1, 1, 1]} : vector<8x24x32xbf16> to vector<8x16x32xbf16>
    %15 = vector.extract_strided_slice %12 {offsets = [0, 2, 0], sizes = [8, 16, 32], strides = [1, 1, 1]} : vector<8x24x32xbf16> to vector<8x16x32xbf16>
    %16 = vector.extract_strided_slice %12 {offsets = [0, 3, 0], sizes = [8, 16, 32], strides = [1, 1, 1]} : vector<8x24x32xbf16> to vector<8x16x32xbf16>
    %17 = vector.extract_strided_slice %12 {offsets = [0, 4, 0], sizes = [8, 16, 32], strides = [1, 1, 1]} : vector<8x24x32xbf16> to vector<8x16x32xbf16>
    %18 = tpu.concatenate %13, %14, %15, %16, %17 in 2 : vector<8x16x32xbf16>, vector<8x16x32xbf16>, vector<8x16x32xbf16>, vector<8x16x32xbf16>, vector<8x16x32xbf16> -> vector<8x16x160xbf16>
    %19 = vector.shape_cast %18 : vector<8x16x160xbf16> to vector<128x160xbf16>
    %c0_3 = arith.constant 0 : index
    %c0_4 = arith.constant 0 : index
    %20 = vector.load %arg3[%c0_3, %c0_4] : memref<160x128xbf16, #tpu.memory_space<vmem>>, vector<160x128xbf16>
    %cst_5 = arith.constant dense<0.000000e+00> : vector<128x128xf32>
    %21 = tpu.matmul %19, %20, %cst_5 {dimension_numbers = #tpu.dot_dimension_numbers<[1], [0], [0], [1], [0, 0, 1, 1], [], []>} : vector<128x160xbf16>, vector<160x128xbf16>, vector<128x128xf32> -> vector<128x128xf32>
    %22 = vector.shape_cast %21 : vector<128x128xf32> to vector<8x16x128xf32>
    %c0_6 = arith.constant 0 : index
    %c0_7 = arith.constant 0 : index
    %23 = vector.load %arg5[%c0_6, %c0_7] : memref<16x128xf32, #tpu.memory_space<vmem>>, vector<16x128xf32>
    %24 = vector.shape_cast %23 : vector<16x128xf32> to vector<1x16x128xf32>
    %25 = vector.broadcast %24 : vector<1x16x128xf32> to vector<8x16x128xf32>
    %26 = arith.addf %22, %25 : vector<8x16x128xf32>
    %cst_8 = arith.constant 0.000000e+00 : f32
    %27 = vector.broadcast %cst_8 : f32 to vector<8x16x128xf32>
    %28 = arith.maximumf %26, %27 : vector<8x16x128xf32>
    %cst_9 = arith.constant dense<0xFF800000> : vector<8x128xf32>
    %29 = vector.multi_reduction <maximumf>, %28, %cst_9 [1] : vector<8x16x128xf32> to vector<8x128xf32>
    %30 = arith.truncf %29 : vector<8x128xf32> to vector<8x128xbf16>
    %c0_10 = arith.constant 0 : index
    %c0_11 = arith.constant 0 : index
    %31 = vector.load %arg4[%c0_10, %c0_11] : memref<128x128xbf16, #tpu.memory_space<vmem>>, vector<128x128xbf16>
    %cst_12 = arith.constant dense<0.000000e+00> : vector<8x128xf32>
    %32 = tpu.matmul %30, %31, %cst_12 {dimension_numbers = #tpu.dot_dimension_numbers<[1], [0], [0], [1], [0, 0, 1, 1], [], []>} : vector<8x128xbf16>, vector<128x128xbf16>, vector<8x128xf32> -> vector<8x128xf32>
    %c0_13 = arith.constant 0 : index
    %c0_14 = arith.constant 0 : index
    %33 = vector.load %arg6[%c0_13, %c0_14] : memref<8x128xf32, #tpu.memory_space<vmem>>, vector<8x128xf32>
    tpu.vector_store %arg6[%c0_13, %c0_14], %32 {strides = array<i32>} : memref<8x128xf32, #tpu.memory_space<vmem>>, vector<8x128xf32>,
    return
  }
  func.func @transform_0(%arg0: i32) -> (i32, i32) {
    %c0_i32 = arith.constant 0 : i32
    %c0_i32_0 = arith.constant 0 : i32
    return %arg0, %c0_i32 : i32, i32
  }
  func.func @transform_1(%arg0: i32) -> (i32, i32) {
    %c0_i32 = arith.constant 0 : i32
    %c0_i32_0 = arith.constant 0 : i32
    %c0_i32_1 = arith.constant 0 : i32
    return %c0_i32, %c0_i32_0 : i32, i32
  }
  func.func @transform_2(%arg0: i32) -> (i32, i32) {
    %c0_i32 = arith.constant 0 : i32
    %c0_i32_0 = arith.constant 0 : i32
    %c0_i32_1 = arith.constant 0 : i32
    return %c0_i32, %c0_i32_0 : i32, i32
  }
  func.func @transform_3(%arg0: i32) -> (i32, i32) {
    %c0_i32 = arith.constant 0 : i32
    %c0_i32_0 = arith.constant 0 : i32
    %c0_i32_1 = arith.constant 0 : i32
    return %c0_i32, %c0_i32_0 : i32, i32
  }
  func.func @transform_4(%arg0: i32) -> (i32, i32) {
    %c0_i32 = arith.constant 0 : i32
    %c0_i32_0 = arith.constant 0 : i32
    %c0_i32_1 = arith.constant 0 : i32
    return %c0_i32, %c0_i32_0 : i32, i32
  }
  func.func @transform_5(%arg0: i32) -> (i32, i32) {
    %c0_i32 = arith.constant 0 : i32
    %c0_i32_0 = arith.constant 0 : i32
    return %arg0, %c0_i32 : i32, i32
  }
}

</mosaic_0001>

<llo_original>
// kernel: _lambda_.1
$region0: #{_lambda_.1}
  #allocation0 [shape = 'u32[]', space=smem, size = 0x4, offset = 0x4, fixed_abs, tag = 'smem constant byte address 0x4 - core index']
  #allocation1 [shape = 'u32[72,128]{1,0:T(1,128)}', space=vmem, size = 0x9000, scoped, tag = 'internal scratch']
  %s0 = inlined_call_operand.vmem [shape: s32[8,24], index: 0, kind: input, shape index: {}]
  %s1 = inlined_call_operand.vmem [shape: bf16[128,32], index: 1, kind: input, shape index: {}]
  %s2 = inlined_call_operand.vmem [shape: bf16[160,128], index: 2, kind: input, shape index: {}]
  %s3 = inlined_call_operand.hbm [shape: bf16[128,128], index: 3, kind: input, shape index: {}]
  %s4 = inlined_call_operand.hbm [shape: f32[16,128], index: 4, kind: input, shape index: {}]
  %s5 = inlined_call_operand.vmem [shape: f32[8,128], index: 5, kind: output, shape index: {}]
  %s6 = sld [smem:[#allocation0]]
  $region38: #{_lambda_.1} parent=0
    _
  %s8 = ssub.s32 1, %s6
  %s9 = scalar_select 0, %s8, %s6
  $region1: #{_lambda_.1} parent=0
    #allocation2 [shape = 'u8[32768]{0}', space=vmem, size = 0x8000, scoped, tag = 'input window, operand 3, single buffered']
    #allocation3 [shape = 's32[1]{0}', space=sflag, size = 0x4, scoped, tag = 'scoped memory for _lambda_.1']
    #allocation4 [shape = 'u8[8192]{0}', space=vmem, size = 0x2000, scoped, tag = 'input window, operand 4, single buffered']
    #allocation5 [shape = 's32[1]{0}', space=sflag, size = 0x4, scoped, tag = 'scoped memory for _lambda_.1']
    %10 = vsyncpa [#allocation3], 0
    %11 = vsyncpa [#allocation5], 0
    // Predicated region
    $region2: #{_lambda_.1} parent=1 // pred_check
      _
    $region3: #{_lambda_.1} parent=1 // pred_check_branch
      %13 = sbr.rel (0) target = $region5
    $region4: #{_lambda_.1} parent=1 // pred_region
      _
    $region5: #{_lambda_.1} parent=1 // pred_fallthru
      _
    // Predicated region
    $region6: #{_lambda_.1} parent=1 // pred_check
      _
    $region7: #{_lambda_.1} parent=1 // pred_check_branch
      %15 = sbr.rel (0) target = $region9
    $region8: #{_lambda_.1} parent=1 // pred_region
      _
    $region9: #{_lambda_.1} parent=1 // pred_fallthru
      _
    // Predicated region
    $region10: #{_lambda_.1} parent=1 // pred_check
      _
    $region11: #{_lambda_.1} parent=1 // pred_check_branch
      %17 = sbr.rel (0) target = $region13
    $region12: #{_lambda_.1} parent=1 // pred_region
      _
    $region13: #{_lambda_.1} parent=1 // pred_fallthru
      _
    // Predicated region
    $region14: #{_lambda_.1} parent=1 // pred_check
      _
    $region15: #{_lambda_.1} parent=1 // pred_check_branch
      %19 = sbr.rel (0) target = $region17
    $region16: #{_lambda_.1} parent=1 // pred_region
      %21 = vsyncadd [#allocation3], 0
      %s22 = sshll.u32 %s3, 4
      %s23 = int_to_ptr.hbm [resolvable:$true] %s22
      %s24 = sshll.u32 [#allocation2], 4
      %s25 = int_to_ptr.vmem [resolvable:$true] %s24
      %30 = dma.hbm_to_vmem [thread:$0]  %s23, 1024, %s25, [#allocation3], 64, 64, 4
    $region17: #{_lambda_.1} parent=1 // pred_fallthru
      _
    // Predicated region
    $region18: #{_lambda_.1} parent=1 // pred_check
      _
    $region19: #{_lambda_.1} parent=1 // pred_check_branch
      %32 = sbr.rel (0) target = $region21
    $region20: #{_lambda_.1} parent=1 // pred_region
      %34 = vsyncadd [#allocation5], 0
      %s35 = sshll.u32 %s4, 4
      %s36 = int_to_ptr.hbm [resolvable:$true] %s35
      %s37 = sshll.u32 [#allocation4], 4
      %s38 = int_to_ptr.vmem [resolvable:$true] %s37
      %43 = dma.hbm_to_vmem [thread:$0]  %s36, 256, %s38, [#allocation5], 128, 128, 8
    $region21: #{_lambda_.1} parent=1 // pred_fallthru
      _
    // Predicated region
    $region22: #{_lambda_.1} parent=1 // pred_check
      _
    $region23: #{_lambda_.1} parent=1 // pred_check_branch
      %45 = sbr.rel (0) target = $region25
    $region24: #{_lambda_.1} parent=1 // pred_region
      %47 = dma.done [#allocation3], 1024
    $region25: #{_lambda_.1} parent=1 // pred_fallthru
      _
    // Predicated region
    $region26: #{_lambda_.1} parent=1 // pred_check
      _
    $region27: #{_lambda_.1} parent=1 // pred_check_branch
      %49 = sbr.rel (0) target = $region29
    $region28: #{_lambda_.1} parent=1 // pred_region
      %51 = dma.done [#allocation5], 256
    $region29: #{_lambda_.1} parent=1 // pred_fallthru
      _
    %v53 = vld [vmem:[%s0] sm:$0xff]
    %v54 = vlaneseq
    %v55 = vand.u32 %v54, 127
    %v56 = vperm.slane %v53, 0
    %v57 = vlaneseq
    %v58 = vshrl.u32 %v57, 7
    %60 = vset.pattern.permute.xlu0 %v58
    %61 = vperm.xlu0 %60, %v56
    %v62 = vpop.permute.xlu0 %61
    %v63 = vlaneseq
    %v64 = vshrl.u32 %v63, 7
    %v65 = vadd.s32 %v64, 8
    %66 = vset.pattern.permute.xlu0 %v65
    %67 = vperm.xlu0 %66, %v56
    %v68 = vpop.permute.xlu0 %67
    %v69 = vlaneseq
    %v70 = vshrl.u32 %v69, 7
    %v71 = vadd.s32 %v70, 16
    %72 = vset.pattern.permute.xlu0 %v71
    %73 = vperm.xlu0 %72, %v56
    %v74 = vpop.permute.xlu0 %73
    %v75 = vperm.slane %v53, 1
    %v76 = vlaneseq
    %v77 = vshrl.u32 %v76, 7
    %79 = vset.pattern.permute.xlu0 %v77
    %80 = vperm.xlu0 %79, %v75
    %v81 = vpop.permute.xlu0 %80
    %v82 = vlaneseq
    %v83 = vshrl.u32 %v82, 7
    %v84 = vadd.s32 %v83, 8
    %85 = vset.pattern.permute.xlu0 %v84
    %86 = vperm.xlu0 %85, %v75
    %v87 = vpop.permute.xlu0 %86
    %v88 = vlaneseq
    %v89 = vshrl.u32 %v88, 7
    %v90 = vadd.s32 %v89, 16
    %91 = vset.pattern.permute.xlu0 %v90
    %92 = vperm.xlu0 %91, %v75
    %v93 = vpop.permute.xlu0 %92
    %v94 = vperm.slane %v53, 2
    %v95 = vlaneseq
    %v96 = vshrl.u32 %v95, 7
    %98 = vset.pattern.permute.xlu0 %v96
    %99 = vperm.xlu0 %98, %v94
    %v100 = vpop.permute.xlu0 %99
    %v101 = vlaneseq
    %v102 = vshrl.u32 %v101, 7
    %v103 = vadd.s32 %v102, 8
    %104 = vset.pattern.permute.xlu0 %v103
    %105 = vperm.xlu0 %104, %v94
    %v106 = vpop.permute.xlu0 %105
    %v107 = vlaneseq
    %v108 = vshrl.u32 %v107, 7
    %v109 = vadd.s32 %v108, 16
    %110 = vset.pattern.permute.xlu0 %v109
    %111 = vperm.xlu0 %110, %v94
    %v112 = vpop.permute.xlu0 %111
    %v113 = vperm.slane %v53, 3
    %v114 = vlaneseq
    %v115 = vshrl.u32 %v114, 7
    %117 = vset.pattern.permute.xlu0 %v115
    %118 = vperm.xlu0 %117, %v113
    %v119 = vpop.permute.xlu0 %118
    %v120 = vlaneseq
    %v121 = vshrl.u32 %v120, 7
    %v122 = vadd.s32 %v121, 8
    %123 = vset.pattern.permute.xlu0 %v122
    %124 = vperm.xlu0 %123, %v113
    %v125 = vpop.permute.xlu0 %124
    %v126 = vlaneseq
    %v127 = vshrl.u32 %v126, 7
    %v128 = vadd.s32 %v127, 16
    %129 = vset.pattern.permute.xlu0 %v128
    %130 = vperm.xlu0 %129, %v113
    %v131 = vpop.permute.xlu0 %130
    %v132 = vperm.slane %v53, 4
    %v133 = vlaneseq
    %v134 = vshrl.u32 %v133, 7
    %136 = vset.pattern.permute.xlu0 %v134
    %137 = vperm.xlu0 %136, %v132
    %v138 = vpop.permute.xlu0 %137
    %v139 = vlaneseq
    %v140 = vshrl.u32 %v139, 7
    %v141 = vadd.s32 %v140, 8
    %142 = vset.pattern.permute.xlu0 %v141
    %143 = vperm.xlu0 %142, %v132
    %v144 = vpop.permute.xlu0 %143
    %v145 = vlaneseq
    %v146 = vshrl.u32 %v145, 7
    %v147 = vadd.s32 %v146, 16
    %148 = vset.pattern.permute.xlu0 %v147
    %149 = vperm.xlu0 %148, %v132
    %v150 = vpop.permute.xlu0 %149
    %v151 = vperm.slane %v53, 5
    %v152 = vlaneseq
    %v153 = vshrl.u32 %v152, 7
    %155 = vset.pattern.permute.xlu0 %v153
    %156 = vperm.xlu0 %155, %v151
    %v157 = vpop.permute.xlu0 %156
    %v158 = vlaneseq
    %v159 = vshrl.u32 %v158, 7
    %v160 = vadd.s32 %v159, 8
    %161 = vset.pattern.permute.xlu0 %v160
    %162 = vperm.xlu0 %161, %v151
    %v163 = vpop.permute.xlu0 %162
    %v164 = vlaneseq
    %v165 = vshrl.u32 %v164, 7
    %v166 = vadd.s32 %v165, 16
    %167 = vset.pattern.permute.xlu0 %v166
    %168 = vperm.xlu0 %167, %v151
    %v169 = vpop.permute.xlu0 %168
    %v170 = vperm.slane %v53, 6
    %v171 = vlaneseq
    %v172 = vshrl.u32 %v171, 7
    %174 = vset.pattern.permute.xlu0 %v172
    %175 = vperm.xlu0 %174, %v170
    %v176 = vpop.permute.xlu0 %175
    %v177 = vlaneseq
    %v178 = vshrl.u32 %v177, 7
    %v179 = vadd.s32 %v178, 8
    %180 = vset.pattern.permute.xlu0 %v179
    %181 = vperm.xlu0 %180, %v170
    %v182 = vpop.permute.xlu0 %181
    %v183 = vlaneseq
    %v184 = vshrl.u32 %v183, 7
    %v185 = vadd.s32 %v184, 16
    %186 = vset.pattern.permute.xlu0 %v185
    %187 = vperm.xlu0 %186, %v170
    %v188 = vpop.permute.xlu0 %187
    %v189 = vperm.slane %v53, 7
    %v190 = vlaneseq
    %v191 = vshrl.u32 %v190, 7
    %193 = vset.pattern.permute.xlu0 %v191
    %194 = vperm.xlu0 %193, %v189
    %v195 = vpop.permute.xlu0 %194
    %v196 = vlaneseq
    %v197 = vshrl.u32 %v196, 7
    %v198 = vadd.s32 %v197, 8
    %199 = vset.pattern.permute.xlu0 %v198
    %200 = vperm.xlu0 %199, %v189
    %v201 = vpop.permute.xlu0 %200
    %v202 = vlaneseq
    %v203 = vshrl.u32 %v202, 7
    %v204 = vadd.s32 %v203, 16
    %205 = vset.pattern.permute.xlu0 %v204
    %206 = vperm.xlu0 %205, %v189
    %v207 = vpop.permute.xlu0 %206
    %vm208 = vcmp.eq.s32.totalorder %v62, %v55
    %vm209 = vcmp.eq.s32.totalorder %v68, %v55
    %vm210 = vcmp.eq.s32.totalorder %v74, %v55
    %vm211 = vcmp.eq.s32.totalorder %v81, %v55
    %vm212 = vcmp.eq.s32.totalorder %v87, %v55
    %vm213 = vcmp.eq.s32.totalorder %v93, %v55
    %vm214 = vcmp.eq.s32.totalorder %v100, %v55
    %vm215 = vcmp.eq.s32.totalorder %v106, %v55
    %vm216 = vcmp.eq.s32.totalorder %v112, %v55
    %vm217 = vcmp.eq.s32.totalorder %v119, %v55
    %vm218 = vcmp.eq.s32.totalorder %v125, %v55
    %vm219 = vcmp.eq.s32.totalorder %v131, %v55
    %vm220 = vcmp.eq.s32.totalorder %v138, %v55
    %vm221 = vcmp.eq.s32.totalorder %v144, %v55
    %vm222 = vcmp.eq.s32.totalorder %v150, %v55
    %vm223 = vcmp.eq.s32.totalorder %v157, %v55
    %vm224 = vcmp.eq.s32.totalorder %v163, %v55
    %vm225 = vcmp.eq.s32.totalorder %v169, %v55
    %vm226 = vcmp.eq.s32.totalorder %v176, %v55
    %vm227 = vcmp.eq.s32.totalorder %v182, %v55
    %vm228 = vcmp.eq.s32.totalorder %v188, %v55
    %vm229 = vcmp.eq.s32.totalorder %v195, %v55
    %vm230 = vcmp.eq.s32.totalorder %v201, %v55
    %vm231 = vcmp.eq.s32.totalorder %v207, %v55
    %v232 = vsel %vm208, 1, 0
    %v233 = vsel %vm209, 1, 0
    %v234 = vsel %vm210, 1, 0
    %v235 = vsel %vm211, 1, 0
    %v236 = vsel %vm212, 1, 0
    %v237 = vsel %vm213, 1, 0
    %v238 = vsel %vm214, 1, 0
    %v239 = vsel %vm215, 1, 0
    %v240 = vsel %vm216, 1, 0
    %v241 = vsel %vm217, 1, 0
    %v242 = vsel %vm218, 1, 0
    %v243 = vsel %vm219, 1, 0
    %v244 = vsel %vm220, 1, 0
    %v245 = vsel %vm221, 1, 0
    %v246 = vsel %vm222, 1, 0
    %v247 = vsel %vm223, 1, 0
    %v248 = vsel %vm224, 1, 0
    %v249 = vsel %vm225, 1, 0
    %v250 = vsel %vm226, 1, 0
    %v251 = vsel %vm227, 1, 0
    %v252 = vsel %vm228, 1, 0
    %v253 = vsel %vm229, 1, 0
    %v254 = vsel %vm230, 1, 0
    %v255 = vsel %vm231, 1, 0
    %v256 = vcvt.s32.f32 %v232
    %v257 = vcvt.s32.f32 %v233
    %v258 = vcvt.s32.f32 %v234
    %v259 = vcvt.s32.f32 %v235
    %v260 = vcvt.s32.f32 %v236
    %v261 = vcvt.s32.f32 %v237
    %v262 = vcvt.s32.f32 %v238
    %v263 = vcvt.s32.f32 %v239
    %v264 = vcvt.s32.f32 %v240
    %v265 = vcvt.s32.f32 %v241
    %v266 = vcvt.s32.f32 %v242
    %v267 = vcvt.s32.f32 %v243
    %v268 = vcvt.s32.f32 %v244
    %v269 = vcvt.s32.f32 %v245
    %v270 = vcvt.s32.f32 %v246
    %v271 = vcvt.s32.f32 %v247
    %v272 = vcvt.s32.f32 %v248
    %v273 = vcvt.s32.f32 %v249
    %v274 = vcvt.s32.f32 %v250
    %v275 = vcvt.s32.f32 %v251
    %v276 = vcvt.s32.f32 %v252
    %v277 = vcvt.s32.f32 %v253
    %v278 = vcvt.s32.f32 %v254
    %v279 = vcvt.s32.f32 %v255
    %v280 = vpack.c.bf16 %v256, %v256
    %v281 = vpack.c.bf16 %v257, %v257
    %v282 = vpack.c.bf16 %v258, %v258
    %v283 = vpack.c.bf16 %v259, %v259
    %v284 = vpack.c.bf16 %v260, %v260
    %v285 = vpack.c.bf16 %v261, %v261
    %v286 = vpack.c.bf16 %v262, %v262
    %v287 = vpack.c.bf16 %v263, %v263
    %v288 = vpack.c.bf16 %v264, %v264
    %v289 = vpack.c.bf16 %v265, %v265
    %v290 = vpack.c.bf16 %v266, %v266
    %v291 = vpack.c.bf16 %v267, %v267
    %v292 = vpack.c.bf16 %v268, %v268
    %v293 = vpack.c.bf16 %v269, %v269
    %v294 = vpack.c.bf16 %v270, %v270
    %v295 = vpack.c.bf16 %v271, %v271
    %v296 = vpack.c.bf16 %v272, %v272
    %v297 = vpack.c.bf16 %v273, %v273
    %v298 = vpack.c.bf16 %v274, %v274
    %v299 = vpack.c.bf16 %v275, %v275
    %v300 = vpack.c.bf16 %v276, %v276
    %v301 = vpack.c.bf16 %v277, %v277
    %v302 = vpack.c.bf16 %v278, %v278
    %v303 = vpack.c.bf16 %v279, %v279
    %v304 = vld [vmem:[%s1] sm:$0xf]
    %v305 = vld [vmem:[%s1 + $0x4] sm:$0xf]
    %v306 = vld [vmem:[%s1 + $0x8] sm:$0xf]
    %v307 = vld [vmem:[%s1 + $0xc] sm:$0xf]
    %v308 = vld [vmem:[%s1 + $0x10] sm:$0xf]
    %v309 = vld [vmem:[%s1 + $0x14] sm:$0xf]
    %v310 = vld [vmem:[%s1 + $0x18] sm:$0xf]
    %v311 = vld [vmem:[%s1 + $0x1c] sm:$0xf]
    %v312 = vld [vmem:[%s1 + $0x20] sm:$0xf]
    %v313 = vld [vmem:[%s1 + $0x24] sm:$0xf]
    %v314 = vld [vmem:[%s1 + $0x28] sm:$0xf]
    %v315 = vld [vmem:[%s1 + $0x2c] sm:$0xf]
    %v316 = vld [vmem:[%s1 + $0x30] sm:$0xf]
    %v317 = vld [vmem:[%s1 + $0x34] sm:$0xf]
    %v318 = vld [vmem:[%s1 + $0x38] sm:$0xf]
    %v319 = vld [vmem:[%s1 + $0x3c] sm:$0xf]
    %v344 = vunpack.c.l.b16 %v280
    %v345 = vunpack.c.l.b16 %v281
    %v346 = vunpack.c.l.b16 %v282
    %v347 = vunpack.c.l.b16 %v283
    %v348 = vunpack.c.l.b16 %v284
    %v349 = vunpack.c.l.b16 %v285
    %v350 = vunpack.c.l.b16 %v286
    %v351 = vunpack.c.l.b16 %v287
    %v352 = vunpack.c.l.b16 %v288
    %v353 = vunpack.c.l.b16 %v289
    %v354 = vunpack.c.l.b16 %v290
    %v355 = vunpack.c.l.b16 %v291
    %v356 = vunpack.c.l.b16 %v292
    %v357 = vunpack.c.l.b16 %v293
    %v358 = vunpack.c.l.b16 %v294
    %v359 = vunpack.c.l.b16 %v295
    %v360 = vunpack.c.l.b16 %v296
    %v361 = vunpack.c.l.b16 %v297
    %v362 = vunpack.c.l.b16 %v298
    %v363 = vunpack.c.l.b16 %v299
    %v364 = vunpack.c.l.b16 %v300
    %v365 = vunpack.c.l.b16 %v301
    %v366 = vunpack.c.l.b16 %v302
    %v367 = vunpack.c.l.b16 %v303
    %v368 = vpack.c.b16 %v345, %v344
    %v369 = vpack.c.b16 %v347, %v346
    %v370 = vpack.c.b16 %v349, %v348
    %v371 = vpack.c.b16 %v351, %v350
    %v372 = vpack.c.b16 %v353, %v352
    %v373 = vpack.c.b16 %v355, %v354
    %v374 = vpack.c.b16 %v357, %v356
    %v375 = vpack.c.b16 %v359, %v358
    %v376 = vpack.c.b16 %v361, %v360
    %v377 = vpack.c.b16 %v363, %v362
    %v378 = vpack.c.b16 %v365, %v364
    %v379 = vpack.c.b16 %v367, %v366
    %v408 = vunpack.c.l.b16 %v304
    %v409 = vunpack.c.l.b16 %v305
    %v410 = vunpack.c.l.b16 %v306
    %v411 = vunpack.c.l.b16 %v307
    %v412 = vunpack.c.l.b16 %v308
    %v413 = vunpack.c.l.b16 %v309
    %v414 = vunpack.c.l.b16 %v310
    %v415 = vunpack.c.l.b16 %v311
    %v416 = vunpack.c.l.b16 %v312
    %v417 = vunpack.c.l.b16 %v313
    %v418 = vunpack.c.l.b16 %v314
    %v419 = vunpack.c.l.b16 %v315
    %v420 = vunpack.c.l.b16 %v316
    %v421 = vunpack.c.l.b16 %v317
    %v422 = vunpack.c.l.b16 %v318
    %v423 = vunpack.c.l.b16 %v319
    %v424 = vpack.c.b16 %v409, %v408
    %v425 = vpack.c.b16 %v411, %v410
    %v426 = vpack.c.b16 %v413, %v412
    %v427 = vpack.c.b16 %v415, %v414
    %v428 = vpack.c.b16 %v417, %v416
    %v429 = vpack.c.b16 %v419, %v418
    %v430 = vpack.c.b16 %v421, %v420
    %v431 = vpack.c.b16 %v423, %v422
    %440 = vmatpush.bf16.msra.mxu0 %v431
    %441 = vmatpush.bf16.msra.mxu0 %v430
    %442 = vmatpush.bf16.msra.mxu0 %v429
    %443 = vmatpush.bf16.msra.mxu0 %v428
    %444 = vmatpush.bf16.msra.mxu0 %v427
    %445 = vmatpush.bf16.msra.mxu0 %v426
    %446 = vmatpush.bf16.msra.mxu0 %v425
    %447 = vmatpush.bf16.msra.mxu0 %v424
    %448 = vmatmul.bf16.gmra.mxu0 %v368
    %v449 = vpop.f32.mrf.mxu0
    %v450 = vadd.f32 0.0, %v449
    %v451 = vpop.f32.mrf.mxu0
    %v452 = vadd.f32 0.0, %v451
    %453 = vmatmul.bf16.gmra.mxu0 %v369
    %v454 = vpop.f32.mrf.mxu0
    %v455 = vadd.f32 0.0, %v454
    %v456 = vpop.f32.mrf.mxu0
    %v457 = vadd.f32 0.0, %v456
    %458 = vmatmul.bf16.gmra.mxu0 %v370
    %v459 = vpop.f32.mrf.mxu0
    %v460 = vadd.f32 0.0, %v459
    %v461 = vpop.f32.mrf.mxu0
    %v462 = vadd.f32 0.0, %v461
    %463 = vmatmul.bf16.gmra.mxu0 %v371
    %v464 = vpop.f32.mrf.mxu0
    %v465 = vadd.f32 0.0, %v464
    %v466 = vpop.f32.mrf.mxu0
    %v467 = vadd.f32 0.0, %v466
    %468 = vmatmul.bf16.gmra.mxu0 %v372
    %v469 = vpop.f32.mrf.mxu0
    %v470 = vadd.f32 0.0, %v469
    %v471 = vpop.f32.mrf.mxu0
    %v472 = vadd.f32 0.0, %v471
    %473 = vmatmul.bf16.gmra.mxu0 %v373
    %v474 = vpop.f32.mrf.mxu0
    %v475 = vadd.f32 0.0, %v474
    %v476 = vpop.f32.mrf.mxu0
    %v477 = vadd.f32 0.0, %v476
    %478 = vmatmul.bf16.gmra.mxu0 %v374
    %v479 = vpop.f32.mrf.mxu0
    %v480 = vadd.f32 0.0, %v479
    %v481 = vpop.f32.mrf.mxu0
    %v482 = vadd.f32 0.0, %v481
    %483 = vmatmul.bf16.gmra.mxu0 %v375
    %v484 = vpop.f32.mrf.mxu0
    %v485 = vadd.f32 0.0, %v484
    %v486 = vpop.f32.mrf.mxu0
    %v487 = vadd.f32 0.0, %v486
    %488 = vmatmul.bf16.gmra.mxu0 %v376
    %v489 = vpop.f32.mrf.mxu0
    %v490 = vadd.f32 0.0, %v489
    %v491 = vpop.f32.mrf.mxu0
    %v492 = vadd.f32 0.0, %v491
    %493 = vmatmul.bf16.gmra.mxu0 %v377
    %v494 = vpop.f32.mrf.mxu0
    %v495 = vadd.f32 0.0, %v494
    %v496 = vpop.f32.mrf.mxu0
    %v497 = vadd.f32 0.0, %v496
    %498 = vmatmul.bf16.gmra.mxu0 %v378
    %v499 = vpop.f32.mrf.mxu0
    %v500 = vadd.f32 0.0, %v499
    %v501 = vpop.f32.mrf.mxu0
    %v502 = vadd.f32 0.0, %v501
    %503 = vmatmul.bf16.gmra.mxu0 %v379
    %v504 = vpop.f32.mrf.mxu0
    %v505 = vadd.f32 0.0, %v504
    %v506 = vpop.f32.mrf.mxu0
    %v507 = vadd.f32 0.0, %v506
    %508 = vdwg.mxu0
    %v509 = vpack.c.bf16 %v450, %v450
    %v510 = vpack.c.bf16 %v452, %v452
    %v511 = vpack.c.bf16 %v455, %v455
    %v512 = vpack.c.bf16 %v457, %v457
    %v513 = vpack.c.bf16 %v460, %v460
    %v514 = vpack.c.bf16 %v462, %v462
    %v515 = vpack.c.bf16 %v465, %v465
    %v516 = vpack.c.bf16 %v467, %v467
    %v517 = vpack.c.bf16 %v470, %v470
    %v518 = vpack.c.bf16 %v472, %v472
    %v519 = vpack.c.bf16 %v475, %v475
    %v520 = vpack.c.bf16 %v477, %v477
    %v521 = vpack.c.bf16 %v480, %v480
    %v522 = vpack.c.bf16 %v482, %v482
    %v523 = vpack.c.bf16 %v485, %v485
    %v524 = vpack.c.bf16 %v487, %v487
    %v525 = vpack.c.bf16 %v490, %v490
    %v526 = vpack.c.bf16 %v492, %v492
    %v527 = vpack.c.bf16 %v495, %v495
    %v528 = vpack.c.bf16 %v497, %v497
    %v529 = vpack.c.bf16 %v500, %v500
    %v530 = vpack.c.bf16 %v502, %v502
    %v531 = vpack.c.bf16 %v505, %v505
    %v532 = vpack.c.bf16 %v507, %v507
    %v549 = vunpack.c.l.b16 %v509
    %v550 = vunpack.c.l.b16 %v510
    %v551 = vunpack.c.l.b16 %v512
    %v552 = vunpack.c.l.b16 %v513
    %v553 = vunpack.c.l.b16 %v515
    %v554 = vunpack.c.l.b16 %v516
    %v555 = vunpack.c.l.b16 %v518
    %v556 = vunpack.c.l.b16 %v519
    %v557 = vunpack.c.l.b16 %v521
    %v558 = vunpack.c.l.b16 %v522
    %v559 = vunpack.c.l.b16 %v524
    %v560 = vunpack.c.l.b16 %v525
    %v561 = vunpack.c.l.b16 %v527
    %v562 = vunpack.c.l.b16 %v528
    %v563 = vunpack.c.l.b16 %v530
    %v564 = vunpack.c.l.b16 %v531
    %v565 = vpack.c.b16 %v550, %v549
    %v566 = vpack.c.b16 %v552, %v551
    %v567 = vpack.c.b16 %v554, %v553
    %v568 = vpack.c.b16 %v556, %v555
    %v569 = vpack.c.b16 %v558, %v557
    %v570 = vpack.c.b16 %v560, %v559
    %v571 = vpack.c.b16 %v562, %v561
    %v572 = vpack.c.b16 %v564, %v563
    %v581 = vunpack.c.l.b16 %v511
    %v582 = vunpack.c.l.b16 %v514
    %v583 = vunpack.c.l.b16 %v517
    %v584 = vunpack.c.l.b16 %v520
    %v585 = vunpack.c.l.b16 %v523
    %v586 = vunpack.c.l.b16 %v526
    %v587 = vunpack.c.l.b16 %v529
    %v588 = vunpack.c.l.b16 %v532
    %v589 = vpack.c.b16 %v581, %v581
    %v590 = vpack.c.b16 %v582, %v582
    %v591 = vpack.c.b16 %v583, %v583
    %v592 = vpack.c.b16 %v584, %v584
    %v593 = vpack.c.b16 %v585, %v585
    %v594 = vpack.c.b16 %v586, %v586
    %v595 = vpack.c.b16 %v587, %v587
    %v596 = vpack.c.b16 %v588, %v588
    %vm597 = vsmask.f32 7424
    %v599 = vshrl.u32 %v565, 16
    %v601 = vshll.u32 %v565, 16
    %v603 = vrot.slane %v601, 1
    %v604 = vor.u32 %v599, %v603
    %v606 = vshll.u32 %v589, 16
    %v608 = vrot.slane %v606, 1
    %v609 = vsel %vm597, %v604, %v608
    %v611 = vshrl.u32 %v566, 16
    %v613 = vshll.u32 %v566, 16
    %v615 = vrot.slane %v613, 1
    %v616 = vor.u32 %v611, %v615
    %v618 = vshll.u32 %v590, 16
    %v620 = vrot.slane %v618, 1
    %v621 = vsel %vm597, %v616, %v620
    %v623 = vshrl.u32 %v567, 16
    %v625 = vshll.u32 %v567, 16
    %v627 = vrot.slane %v625, 1
    %v628 = vor.u32 %v623, %v627
    %v630 = vshll.u32 %v591, 16
    %v632 = vrot.slane %v630, 1
    %v633 = vsel %vm597, %v628, %v632
    %v635 = vshrl.u32 %v568, 16
    %v637 = vshll.u32 %v568, 16
    %v639 = vrot.slane %v637, 1
    %v640 = vor.u32 %v635, %v639
    %v642 = vshll.u32 %v592, 16
    %v644 = vrot.slane %v642, 1
    %v645 = vsel %vm597, %v640, %v644
    %v647 = vshrl.u32 %v569, 16
    %v649 = vshll.u32 %v569, 16
    %v651 = vrot.slane %v649, 1
    %v652 = vor.u32 %v647, %v651
    %v654 = vshll.u32 %v593, 16
    %v656 = vrot.slane %v654, 1
    %v657 = vsel %vm597, %v652, %v656
    %v659 = vshrl.u32 %v570, 16
    %v661 = vshll.u32 %v570, 16
    %v663 = vrot.slane %v661, 1
    %v664 = vor.u32 %v659, %v663
    %v666 = vshll.u32 %v594, 16
    %v668 = vrot.slane %v666, 1
    %v669 = vsel %vm597, %v664, %v668
    %v671 = vshrl.u32 %v571, 16
    %v673 = vshll.u32 %v571, 16
    %v675 = vrot.slane %v673, 1
    %v676 = vor.u32 %v671, %v675
    %v678 = vshll.u32 %v595, 16
    %v680 = vrot.slane %v678, 1
    %v681 = vsel %vm597, %v676, %v680
    %v683 = vshrl.u32 %v572, 16
    %v685 = vshll.u32 %v572, 16
    %v687 = vrot.slane %v685, 1
    %v688 = vor.u32 %v683, %v687
    %v690 = vshll.u32 %v596, 16
    %v692 = vrot.slane %v690, 1
    %v693 = vsel %vm597, %v688, %v692
    %694 = vrot.lane.b32.xlu0 %v609, 32
    %v695 = vpop.permute.xlu0 %694
    %696 = vrot.lane.b32.xlu0 %v621, 32
    %v697 = vpop.permute.xlu0 %696
    %698 = vrot.lane.b32.xlu0 %v633, 32
    %v699 = vpop.permute.xlu0 %698
    %700 = vrot.lane.b32.xlu0 %v645, 32
    %v701 = vpop.permute.xlu0 %700
    %702 = vrot.lane.b32.xlu0 %v657, 32
    %v703 = vpop.permute.xlu0 %702
    %704 = vrot.lane.b32.xlu0 %v669, 32
    %v705 = vpop.permute.xlu0 %704
    %706 = vrot.lane.b32.xlu0 %v681, 32
    %v707 = vpop.permute.xlu0 %706
    %708 = vrot.lane.b32.xlu0 %v693, 32
    %v709 = vpop.permute.xlu0 %708
    %vm710 = vcmask 1046528
    %v711 = vrot.slane %v565, 1
    %v712 = vrot.slane %v589, 1
    %v713 = vsel %vm710, %v711, %v712
    %v714 = vrot.slane %v566, 1
    %v715 = vrot.slane %v590, 1
    %v716 = vsel %vm710, %v714, %v715
    %v717 = vrot.slane %v567, 1
    %v718 = vrot.slane %v591, 1
    %v719 = vsel %vm710, %v717, %v718
    %v720 = vrot.slane %v568, 1
    %v721 = vrot.slane %v592, 1
    %v722 = vsel %vm710, %v720, %v721
    %v723 = vrot.slane %v569, 1
    %v724 = vrot.slane %v593, 1
    %v725 = vsel %vm710, %v723, %v724
    %v726 = vrot.slane %v570, 1
    %v727 = vrot.slane %v594, 1
    %v728 = vsel %vm710, %v726, %v727
    %v729 = vrot.slane %v571, 1
    %v730 = vrot.slane %v595, 1
    %v731 = vsel %vm710, %v729, %v730
    %v732 = vrot.slane %v572, 1
    %v733 = vrot.slane %v596, 1
    %v734 = vsel %vm710, %v732, %v733
    %735 = vrot.lane.b32.xlu0 %v713, 64
    %v736 = vpop.permute.xlu0 %735
    %737 = vrot.lane.b32.xlu0 %v716, 64
    %v738 = vpop.permute.xlu0 %737
    %739 = vrot.lane.b32.xlu0 %v719, 64
    %v740 = vpop.permute.xlu0 %739
    %741 = vrot.lane.b32.xlu0 %v722, 64
    %v742 = vpop.permute.xlu0 %741
    %743 = vrot.lane.b32.xlu0 %v725, 64
    %v744 = vpop.permute.xlu0 %743
    %745 = vrot.lane.b32.xlu0 %v728, 64
    %v746 = vpop.permute.xlu0 %745
    %747 = vrot.lane.b32.xlu0 %v731, 64
    %v748 = vpop.permute.xlu0 %747
    %749 = vrot.lane.b32.xlu0 %v734, 64
    %v750 = vpop.permute.xlu0 %749
    %vm751 = vsmask.f32 6400
    %v752 = vrot.slane %v599, 1
    %v753 = vrot.slane %v601, 2
    %v754 = vor.u32 %v752, %v753
    %v755 = vshrl.u32 %v589, 16
    %v757 = vrot.slane %v755, 1
    %v758 = vrot.slane %v606, 2
    %v759 = vor.u32 %v757, %v758
    %v760 = vsel %vm751, %v754, %v759
    %v761 = vrot.slane %v611, 1
    %v762 = vrot.slane %v613, 2
    %v763 = vor.u32 %v761, %v762
    %v764 = vshrl.u32 %v590, 16
    %v766 = vrot.slane %v764, 1
    %v767 = vrot.slane %v618, 2
    %v768 = vor.u32 %v766, %v767
    %v769 = vsel %vm751, %v763, %v768
    %v770 = vrot.slane %v623, 1
    %v771 = vrot.slane %v625, 2
    %v772 = vor.u32 %v770, %v771
    %v773 = vshrl.u32 %v591, 16
    %v775 = vrot.slane %v773, 1
    %v776 = vrot.slane %v630, 2
    %v777 = vor.u32 %v775, %v776
    %v778 = vsel %vm751, %v772, %v777
    %v779 = vrot.slane %v635, 1
    %v780 = vrot.slane %v637, 2
    %v781 = vor.u32 %v779, %v780
    %v782 = vshrl.u32 %v592, 16
    %v784 = vrot.slane %v782, 1
    %v785 = vrot.slane %v642, 2
    %v786 = vor.u32 %v784, %v785
    %v787 = vsel %vm751, %v781, %v786
    %v788 = vrot.slane %v647, 1
    %v789 = vrot.slane %v649, 2
    %v790 = vor.u32 %v788, %v789
    %v791 = vshrl.u32 %v593, 16
    %v793 = vrot.slane %v791, 1
    %v794 = vrot.slane %v654, 2
    %v795 = vor.u32 %v793, %v794
    %v796 = vsel %vm751, %v790, %v795
    %v797 = vrot.slane %v659, 1
    %v798 = vrot.slane %v661, 2
    %v799 = vor.u32 %v797, %v798
    %v800 = vshrl.u32 %v594, 16
    %v802 = vrot.slane %v800, 1
    %v803 = vrot.slane %v666, 2
    %v804 = vor.u32 %v802, %v803
    %v805 = vsel %vm751, %v799, %v804
    %v806 = vrot.slane %v671, 1
    %v807 = vrot.slane %v673, 2
    %v808 = vor.u32 %v806, %v807
    %v809 = vshrl.u32 %v595, 16
    %v811 = vrot.slane %v809, 1
    %v812 = vrot.slane %v678, 2
    %v813 = vor.u32 %v811, %v812
    %v814 = vsel %vm751, %v808, %v813
    %v815 = vrot.slane %v683, 1
    %v816 = vrot.slane %v685, 2
    %v817 = vor.u32 %v815, %v816
    %v818 = vshrl.u32 %v596, 16
    %v820 = vrot.slane %v818, 1
    %v821 = vrot.slane %v690, 2
    %v822 = vor.u32 %v820, %v821
    %v823 = vsel %vm751, %v817, %v822
    %824 = vrot.lane.b32.xlu0 %v760, 96
    %v825 = vpop.permute.xlu0 %824
    %826 = vrot.lane.b32.xlu0 %v769, 96
    %v827 = vpop.permute.xlu0 %826
    %828 = vrot.lane.b32.xlu0 %v778, 96
    %v829 = vpop.permute.xlu0 %828
    %830 = vrot.lane.b32.xlu0 %v787, 96
    %v831 = vpop.permute.xlu0 %830
    %832 = vrot.lane.b32.xlu0 %v796, 96
    %v833 = vpop.permute.xlu0 %832
    %834 = vrot.lane.b32.xlu0 %v805, 96
    %v835 = vpop.permute.xlu0 %834
    %836 = vrot.lane.b32.xlu0 %v814, 96
    %v837 = vpop.permute.xlu0 %836
    %838 = vrot.lane.b32.xlu0 %v823, 96
    %v839 = vpop.permute.xlu0 %838
    %vm840 = vcmask 1045504
    %v841 = vrot.slane %v565, 2
    %v842 = vrot.slane %v589, 2
    %v843 = vsel %vm840, %v841, %v842
    %v844 = vrot.slane %v566, 2
    %v845 = vrot.slane %v590, 2
    %v846 = vsel %vm840, %v844, %v845
    %v847 = vrot.slane %v567, 2
    %v848 = vrot.slane %v591, 2
    %v849 = vsel %vm840, %v847, %v848
    %v850 = vrot.slane %v568, 2
    %v851 = vrot.slane %v592, 2
    %v852 = vsel %vm840, %v850, %v851
    %v853 = vrot.slane %v569, 2
    %v854 = vrot.slane %v593, 2
    %v855 = vsel %vm840, %v853, %v854
    %v856 = vrot.slane %v570, 2
    %v857 = vrot.slane %v594, 2
    %v858 = vsel %vm840, %v856, %v857
    %v859 = vrot.slane %v571, 2
    %v860 = vrot.slane %v595, 2
    %v861 = vsel %vm840, %v859, %v860
    %v862 = vrot.slane %v572, 2
    %v863 = vrot.slane %v596, 2
    %v864 = vsel %vm840, %v862, %v863
    %vm865 = vcmask 261120
    %v867 = vsel %vm865, %v565, %v695
    %v869 = vsel %vm865, %v566, %v697
    %v871 = vsel %vm865, %v567, %v699
    %v873 = vsel %vm865, %v568, %v701
    %v875 = vsel %vm865, %v569, %v703
    %v877 = vsel %vm865, %v570, %v705
    %v879 = vsel %vm865, %v571, %v707
    %v881 = vsel %vm865, %v572, %v709
    %vm882 = vcmask 523264
    %v884 = vsel %vm882, %v867, %v736
    %v886 = vsel %vm882, %v869, %v738
    %v888 = vsel %vm882, %v871, %v740
    %v890 = vsel %vm882, %v873, %v742
    %v892 = vsel %vm882, %v875, %v744
    %v894 = vsel %vm882, %v877, %v746
    %v896 = vsel %vm882, %v879, %v748
    %v898 = vsel %vm882, %v881, %v750
    %vm899 = vcmask 785408
    %v901 = vsel %vm899, %v884, %v825
    %v904 = vsel %vm899, %v886, %v827
    %v907 = vsel %vm899, %v888, %v829
    %v910 = vsel %vm899, %v890, %v831
    %v913 = vsel %vm899, %v892, %v833
    %v916 = vsel %vm899, %v894, %v835
    %v919 = vsel %vm899, %v896, %v837
    %v922 = vsel %vm899, %v898, %v839
    %v924 = vld [vmem:[%s2] sm:$0xf]
    %v925 = vld [vmem:[%s2 + $0x4] sm:$0xf]
    %v926 = vld [vmem:[%s2 + $0x8] sm:$0xf]
    %v927 = vld [vmem:[%s2 + $0xc] sm:$0xf]
    %v928 = vld [vmem:[%s2 + $0x10] sm:$0xf]
    %v929 = vld [vmem:[%s2 + $0x14] sm:$0xf]
    %v930 = vld [vmem:[%s2 + $0x18] sm:$0xf]
    %v931 = vld [vmem:[%s2 + $0x1c] sm:$0xf]
    %v932 = vld [vmem:[%s2 + $0x20] sm:$0xf]
    %v933 = vld [vmem:[%s2 + $0x24] sm:$0xf]
    %v934 = vld [vmem:[%s2 + $0x28] sm:$0xf]
    %v935 = vld [vmem:[%s2 + $0x2c] sm:$0xf]
    %v936 = vld [vmem:[%s2 + $0x30] sm:$0xf]
    %v937 = vld [vmem:[%s2 + $0x34] sm:$0xf]
    %v938 = vld [vmem:[%s2 + $0x38] sm:$0xf]
    %v939 = vld [vmem:[%s2 + $0x3c] sm:$0xf]
    %v940 = vld [vmem:[%s2 + $0x40] sm:$0xf]
    %v941 = vld [vmem:[%s2 + $0x44] sm:$0xf]
    %v942 = vld [vmem:[%s2 + $0x48] sm:$0xf]
    %v943 = vld [vmem:[%s2 + $0x4c] sm:$0xf]
    %v964 = vunpack.c.l.b16 %v924
    %v965 = vunpack.c.l.b16 %v925
    %v966 = vunpack.c.l.b16 %v926
    %v967 = vunpack.c.l.b16 %v927
    %v968 = vunpack.c.l.b16 %v928
    %v969 = vunpack.c.l.b16 %v929
    %v970 = vunpack.c.l.b16 %v930
    %v971 = vunpack.c.l.b16 %v931
    %v972 = vunpack.c.l.b16 %v932
    %v973 = vunpack.c.l.b16 %v933
    %v974 = vunpack.c.l.b16 %v934
    %v975 = vunpack.c.l.b16 %v935
    %v976 = vunpack.c.l.b16 %v936
    %v977 = vunpack.c.l.b16 %v937
    %v978 = vunpack.c.l.b16 %v938
    %v979 = vunpack.c.l.b16 %v939
    %v980 = vunpack.c.l.b16 %v940
    %v981 = vunpack.c.l.b16 %v941
    %v982 = vunpack.c.l.b16 %v942
    %v983 = vunpack.c.l.b16 %v943
    %v984 = vpack.c.b16 %v965, %v964
    %v985 = vpack.c.b16 %v967, %v966
    %v986 = vpack.c.b16 %v969, %v968
    %v987 = vpack.c.b16 %v971, %v970
    %v988 = vpack.c.b16 %v973, %v972
    %v989 = vpack.c.b16 %v975, %v974
    %v990 = vpack.c.b16 %v977, %v976
    %v991 = vpack.c.b16 %v979, %v978
    %v992 = vpack.c.b16 %v981, %v980
    %v993 = vpack.c.b16 %v983, %v982
    %v1005 = vsel %vm865, %v843, 0
    %v1008 = vsel %vm865, %v846, 0
    %v1011 = vsel %vm865, %v849, 0
    %v1014 = vsel %vm865, %v852, 0
    %v1017 = vsel %vm865, %v855, 0
    %v1020 = vsel %vm865, %v858, 0
    %v1023 = vsel %vm865, %v861, 0
    %v1026 = vsel %vm865, %v864, 0
    %1028 = vmatpush.bf16.msra.mxu0 %v991
    %1029 = vmatpush.bf16.msra.mxu0 %v990
    %1030 = vmatpush.bf16.msra.mxu0 %v989
    %1031 = vmatpush.bf16.msra.mxu0 %v988
    %1032 = vmatpush.bf16.msra.mxu0 %v987
    %1033 = vmatpush.bf16.msra.mxu0 %v986
    %1034 = vmatpush.bf16.msra.mxu0 %v985
    %1035 = vmatpush.bf16.msra.mxu0 %v984
    %1036 = vmatmul.bf16.gmra.mxu0 %v901
    %v1037 = vpop.f32.mrf.mxu0
    %v1038 = vadd.f32 0.0, %v1037
    %v1039 = vpop.f32.mrf.mxu0
    %v1040 = vadd.f32 0.0, %v1039
    %1041 = vmatmul.bf16.gmra.mxu0 %v904
    %v1042 = vpop.f32.mrf.mxu0
    %v1043 = vadd.f32 0.0, %v1042
    %v1044 = vpop.f32.mrf.mxu0
    %v1045 = vadd.f32 0.0, %v1044
    %1046 = vmatmul.bf16.gmra.mxu0 %v907
    %v1047 = vpop.f32.mrf.mxu0
    %v1048 = vadd.f32 0.0, %v1047
    %v1049 = vpop.f32.mrf.mxu0
    %v1050 = vadd.f32 0.0, %v1049
    %1051 = vmatmul.bf16.gmra.mxu0 %v910
    %v1052 = vpop.f32.mrf.mxu0
    %v1053 = vadd.f32 0.0, %v1052
    %v1054 = vpop.f32.mrf.mxu0
    %v1055 = vadd.f32 0.0, %v1054
    %1056 = vmatmul.bf16.gmra.mxu0 %v913
    %v1057 = vpop.f32.mrf.mxu0
    %v1058 = vadd.f32 0.0, %v1057
    %v1059 = vpop.f32.mrf.mxu0
    %v1060 = vadd.f32 0.0, %v1059
    %1061 = vmatmul.bf16.gmra.mxu0 %v916
    %v1062 = vpop.f32.mrf.mxu0
    %v1063 = vadd.f32 0.0, %v1062
    %v1064 = vpop.f32.mrf.mxu0
    %v1065 = vadd.f32 0.0, %v1064
    %1066 = vmatmul.bf16.gmra.mxu0 %v919
    %v1067 = vpop.f32.mrf.mxu0
    %v1068 = vadd.f32 0.0, %v1067
    %v1069 = vpop.f32.mrf.mxu0
    %v1070 = vadd.f32 0.0, %v1069
    %1071 = vmatmul.bf16.gmra.mxu0 %v922
    %v1072 = vpop.f32.mrf.mxu0
    %v1073 = vadd.f32 0.0, %v1072
    %v1074 = vpop.f32.mrf.mxu0
    %v1075 = vadd.f32 0.0, %v1074
    %1076 = vdwg.mxu0
    %1077 = vmatpush.bf16.msra.mxu0 0
    %1078 = vmatpush.bf16.msra.mxu0 0
    %1079 = vmatpush.bf16.msra.mxu0 0
    %1080 = vmatpush.bf16.msra.mxu0 0
    %1081 = vmatpush.bf16.msra.mxu0 0
    %1082 = vmatpush.bf16.msra.mxu0 0
    %1083 = vmatpush.bf16.msra.mxu0 %v993
    %1084 = vmatpush.bf16.msra.mxu0 %v992
    %1085 = vmatmul.bf16.gmra.mxu0 %v1005
    %v1086 = vpop.f32.mrf.mxu0
    %v1087 = vadd.f32 %v1038, %v1086
    %v1088 = vpop.f32.mrf.mxu0
    %v1089 = vadd.f32 %v1040, %v1088
    %1090 = vmatmul.bf16.gmra.mxu0 %v1008
    %v1091 = vpop.f32.mrf.mxu0
    %v1092 = vadd.f32 %v1043, %v1091
    %v1093 = vpop.f32.mrf.mxu0
    %v1094 = vadd.f32 %v1045, %v1093
    %1095 = vmatmul.bf16.gmra.mxu0 %v1011
    %v1096 = vpop.f32.mrf.mxu0
    %v1097 = vadd.f32 %v1048, %v1096
    %v1098 = vpop.f32.mrf.mxu0
    %v1099 = vadd.f32 %v1050, %v1098
    %1100 = vmatmul.bf16.gmra.mxu0 %v1014
    %v1101 = vpop.f32.mrf.mxu0
    %v1102 = vadd.f32 %v1053, %v1101
    %v1103 = vpop.f32.mrf.mxu0
    %v1104 = vadd.f32 %v1055, %v1103
    %1105 = vmatmul.bf16.gmra.mxu0 %v1017
    %v1106 = vpop.f32.mrf.mxu0
    %v1107 = vadd.f32 %v1058, %v1106
    %v1108 = vpop.f32.mrf.mxu0
    %v1109 = vadd.f32 %v1060, %v1108
    %1110 = vmatmul.bf16.gmra.mxu0 %v1020
    %v1111 = vpop.f32.mrf.mxu0
    %v1112 = vadd.f32 %v1063, %v1111
    %v1113 = vpop.f32.mrf.mxu0
    %v1114 = vadd.f32 %v1065, %v1113
    %1115 = vmatmul.bf16.gmra.mxu0 %v1023
    %v1116 = vpop.f32.mrf.mxu0
    %v1117 = vadd.f32 %v1068, %v1116
    %v1118 = vpop.f32.mrf.mxu0
    %v1119 = vadd.f32 %v1070, %v1118
    %1120 = vmatmul.bf16.gmra.mxu0 %v1026
    %v1121 = vpop.f32.mrf.mxu0
    %v1122 = vadd.f32 %v1073, %v1121
    %v1123 = vpop.f32.mrf.mxu0
    %v1124 = vadd.f32 %v1075, %v1123
    %1125 = vdwg.mxu0
    %v1126 = vld [vmem:[#allocation4] sm:$0xff]
    %v1127 = vld [vmem:[#allocation4 + $0x8] sm:$0xff]
    %v1128 = vadd.f32 %v1087, %v1126
    %v1129 = vadd.f32 %v1089, %v1127
    %v1130 = vadd.f32 %v1092, %v1126
    %v1131 = vadd.f32 %v1094, %v1127
    %v1132 = vadd.f32 %v1097, %v1126
    %v1133 = vadd.f32 %v1099, %v1127
    %v1134 = vadd.f32 %v1102, %v1126
    %v1135 = vadd.f32 %v1104, %v1127
    %v1136 = vadd.f32 %v1107, %v1126
    %v1137 = vadd.f32 %v1109, %v1127
    %v1138 = vadd.f32 %v1112, %v1126
    %v1139 = vadd.f32 %v1114, %v1127
    %v1140 = vadd.f32 %v1117, %v1126
    %v1141 = vadd.f32 %v1119, %v1127
    %v1142 = vadd.f32 %v1122, %v1126
    %v1143 = vadd.f32 %v1124, %v1127
    %v1144 = vmax.f32 %v1128, 0.0
    %v1145 = vmax.f32 %v1129, 0.0
    %v1146 = vmax.f32 %v1130, 0.0
    %v1147 = vmax.f32 %v1131, 0.0
    %v1148 = vmax.f32 %v1132, 0.0
    %v1149 = vmax.f32 %v1133, 0.0
    %v1150 = vmax.f32 %v1134, 0.0
    %v1151 = vmax.f32 %v1135, 0.0
    %v1152 = vmax.f32 %v1136, 0.0
    %v1153 = vmax.f32 %v1137, 0.0
    %v1154 = vmax.f32 %v1138, 0.0
    %v1155 = vmax.f32 %v1139, 0.0
    %v1156 = vmax.f32 %v1140, 0.0
    %v1157 = vmax.f32 %v1141, 0.0
    %v1158 = vmax.f32 %v1142, 0.0
    %v1159 = vmax.f32 %v1143, 0.0
    %v1160 = vmax.f32 %v1144, %v1145
    %v1161 = vrot.slane %v1160, 4
    %v1162 = vmax.f32 %v1160, %v1161
    %v1163 = vrot.slane %v1162, 2
    %v1164 = vmax.f32 %v1162, %v1163
    %v1165 = vrot.slane %v1164, 1
    %v1166 = vmax.f32 %v1164, %v1165
    %v1167 = vmax.f32 %v1146, %v1147
    %v1168 = vrot.slane %v1167, 4
    %v1169 = vmax.f32 %v1167, %v1168
    %v1170 = vrot.slane %v1169, 2
    %v1171 = vmax.f32 %v1169, %v1170
    %v1172 = vrot.slane %v1171, 1
    %v1173 = vmax.f32 %v1171, %v1172
    %v1174 = vmax.f32 %v1148, %v1149
    %v1175 = vrot.slane %v1174, 4
    %v1176 = vmax.f32 %v1174, %v1175
    %v1177 = vrot.slane %v1176, 2
    %v1178 = vmax.f32 %v1176, %v1177
    %v1179 = vrot.slane %v1178, 1
    %v1180 = vmax.f32 %v1178, %v1179
    %v1181 = vmax.f32 %v1150, %v1151
    %v1182 = vrot.slane %v1181, 4
    %v1183 = vmax.f32 %v1181, %v1182
    %v1184 = vrot.slane %v1183, 2
    %v1185 = vmax.f32 %v1183, %v1184
    %v1186 = vrot.slane %v1185, 1
    %v1187 = vmax.f32 %v1185, %v1186
    %v1188 = vmax.f32 %v1152, %v1153
    %v1189 = vrot.slane %v1188, 4
    %v1190 = vmax.f32 %v1188, %v1189
    %v1191 = vrot.slane %v1190, 2
    %v1192 = vmax.f32 %v1190, %v1191
    %v1193 = vrot.slane %v1192, 1
    %v1194 = vmax.f32 %v1192, %v1193
    %v1195 = vmax.f32 %v1154, %v1155
    %v1196 = vrot.slane %v1195, 4
    %v1197 = vmax.f32 %v1195, %v1196
    %v1198 = vrot.slane %v1197, 2
    %v1199 = vmax.f32 %v1197, %v1198
    %v1200 = vrot.slane %v1199, 1
    %v1201 = vmax.f32 %v1199, %v1200
    %v1202 = vmax.f32 %v1156, %v1157
    %v1203 = vrot.slane %v1202, 4
    %v1204 = vmax.f32 %v1202, %v1203
    %v1205 = vrot.slane %v1204, 2
    %v1206 = vmax.f32 %v1204, %v1205
    %v1207 = vrot.slane %v1206, 1
    %v1208 = vmax.f32 %v1206, %v1207
    %v1209 = vmax.f32 %v1158, %v1159
    %v1210 = vrot.slane %v1209, 4
    %v1211 = vmax.f32 %v1209, %v1210
    %v1212 = vrot.slane %v1211, 2
    %v1213 = vmax.f32 %v1211, %v1212
    %v1214 = vrot.slane %v1213, 1
    %v1215 = vmax.f32 %v1213, %v1214
    %v1216 = vpack.c.bf16 %v1166, %v1166
    %v1217 = vpack.c.bf16 %v1173, %v1173
    %v1218 = vpack.c.bf16 %v1180, %v1180
    %v1219 = vpack.c.bf16 %v1187, %v1187
    %v1220 = vpack.c.bf16 %v1194, %v1194
    %v1221 = vpack.c.bf16 %v1201, %v1201
    %v1222 = vpack.c.bf16 %v1208, %v1208
    %v1223 = vpack.c.bf16 %v1215, %v1215
    %v1224 = vld [vmem:[#allocation2] sm:$0xf]
    %v1225 = vld [vmem:[#allocation2 + $0x4] sm:$0xf]
    %v1226 = vld [vmem:[#allocation2 + $0x8] sm:$0xf]
    %v1227 = vld [vmem:[#allocation2 + $0xc] sm:$0xf]
    %v1228 = vld [vmem:[#allocation2 + $0x10] sm:$0xf]
    %v1229 = vld [vmem:[#allocation2 + $0x14] sm:$0xf]
    %v1230 = vld [vmem:[#allocation2 + $0x18] sm:$0xf]
    %v1231 = vld [vmem:[#allocation2 + $0x1c] sm:$0xf]
    %v1232 = vld [vmem:[#allocation2 + $0x20] sm:$0xf]
    %v1233 = vld [vmem:[#allocation2 + $0x24] sm:$0xf]
    %v1234 = vld [vmem:[#allocation2 + $0x28] sm:$0xf]
    %v1235 = vld [vmem:[#allocation2 + $0x2c] sm:$0xf]
    %v1236 = vld [vmem:[#allocation2 + $0x30] sm:$0xf]
    %v1237 = vld [vmem:[#allocation2 + $0x34] sm:$0xf]
    %v1238 = vld [vmem:[#allocation2 + $0x38] sm:$0xf]
    %v1239 = vld [vmem:[#allocation2 + $0x3c] sm:$0xf]
    %v1248 = vunpack.c.l.b16 %v1216
    %v1249 = vunpack.c.l.b16 %v1217
    %v1250 = vunpack.c.l.b16 %v1218
    %v1251 = vunpack.c.l.b16 %v1219
    %v1252 = vunpack.c.l.b16 %v1220
    %v1253 = vunpack.c.l.b16 %v1221
    %v1254 = vunpack.c.l.b16 %v1222
    %v1255 = vunpack.c.l.b16 %v1223
    %vm1256 = vcmask 1041409
    %v1257 = vsel %vm1256, %v1249, %v1248
    %vm1258 = vcmask 1042434
    %v1259 = vsel %vm1258, %v1250, %v1257
    %vm1260 = vcmask 1043459
    %v1261 = vsel %vm1260, %v1251, %v1259
    %vm1262 = vcmask 1044484
    %v1263 = vsel %vm1262, %v1252, %v1261
    %vm1264 = vcmask 1045509
    %v1265 = vsel %vm1264, %v1253, %v1263
    %vm1266 = vcmask 1046534
    %v1267 = vsel %vm1266, %v1254, %v1265
    %vm1268 = vcmask 1047559
    %v1269 = vsel %vm1268, %v1255, %v1267
    %v1270 = vpack.c.b16 %v1269, %v1269
    %v1288 = vunpack.c.l.b16 %v1224
    %v1289 = vunpack.c.l.b16 %v1225
    %v1290 = vunpack.c.l.b16 %v1226
    %v1291 = vunpack.c.l.b16 %v1227
    %v1292 = vunpack.c.l.b16 %v1228
    %v1293 = vunpack.c.l.b16 %v1229
    %v1294 = vunpack.c.l.b16 %v1230
    %v1295 = vunpack.c.l.b16 %v1231
    %v1296 = vunpack.c.l.b16 %v1232
    %v1297 = vunpack.c.l.b16 %v1233
    %v1298 = vunpack.c.l.b16 %v1234
    %v1299 = vunpack.c.l.b16 %v1235
    %v1300 = vunpack.c.l.b16 %v1236
    %v1301 = vunpack.c.l.b16 %v1237
    %v1302 = vunpack.c.l.b16 %v1238
    %v1303 = vunpack.c.l.b16 %v1239
    %v1304 = vpack.c.b16 %v1289, %v1288
    %v1305 = vpack.c.b16 %v1291, %v1290
    %v1306 = vpack.c.b16 %v1293, %v1292
    %v1307 = vpack.c.b16 %v1295, %v1294
    %v1308 = vpack.c.b16 %v1297, %v1296
    %v1309 = vpack.c.b16 %v1299, %v1298
    %v1310 = vpack.c.b16 %v1301, %v1300
    %v1311 = vpack.c.b16 %v1303, %v1302
    %1320 = vmatpush.bf16.msra.mxu0 %v1311
    %1321 = vmatpush.bf16.msra.mxu0 %v1310
    %1322 = vmatpush.bf16.msra.mxu0 %v1309
    %1323 = vmatpush.bf16.msra.mxu0 %v1308
    %1324 = vmatpush.bf16.msra.mxu0 %v1307
    %1325 = vmatpush.bf16.msra.mxu0 %v1306
    %1326 = vmatpush.bf16.msra.mxu0 %v1305
    %1327 = vmatpush.bf16.msra.mxu0 %v1304
    %1328 = vmatmul.bf16.gmra.mxu0 %v1270
    %v1329 = vpop.f32.mrf.mxu0
    %v1330 = vadd.f32 0.0, %v1329
    %v1331 = vpop.f32.mrf.mxu0
    %1332 = vdwg.mxu0
    %1333 = vst [vmem:[%s5] sm:$0xff] %v1330
    // Predicated region
    $region30: #{_lambda_.1} parent=1 // pred_check
      _
    $region31: #{_lambda_.1} parent=1 // pred_check_branch
      %1335 = sbr.rel (0) target = $region33
    $region32: #{_lambda_.1} parent=1 // pred_region
      _
    $region33: #{_lambda_.1} parent=1 // pred_fallthru
      _
    // Predicated region
    $region34: #{_lambda_.1} parent=1 // pred_check
      _
    $region35: #{_lambda_.1} parent=1 // pred_check_branch
      %1337 = sbr.rel (0) target = $region37
    $region36: #{_lambda_.1} parent=1 // pred_region
      _
    $region37: #{_lambda_.1} parent=1 // pred_fallthru
      _
    %1338 = vsyncpa [#allocation3], 1
    %1339 = vsyncpa [#allocation5], 1

</llo_original>
